<compile_context>
chip_gen: v5e
topology: v5e:2x2
jax: 0.10.0
libtpu: 0.0.40
codegen_flags: <defaults>
</compile_context>

<pallas_src>
import jax
import jax.numpy as jnp
from jax.experimental import pallas as pl
from jax.experimental.pallas import tpu as pltpu


def attention_kernel(len_ref, ds_ref, lf_ref,
                     wphi_ref, wpsi_ref, bpsi_ref,
                     out_ref):
    bs, T, E = lf_ref.shape

    # tanh(phi(decoder_state)) for the whole batch: one [bs, D] @ [D, M] dot.
    comp_ds = jnp.tanh(
        jnp.dot(ds_ref[...], wphi_ref[...], preferred_element_type=jnp.float32))

    wpsi = wpsi_ref[...]          # [E, M]   (stays in vregs/VMEM for all rows)
    bpsi = bpsi_ref[...]          # [1, M]
    t_idx = jax.lax.broadcasted_iota(jnp.int32, (1, T), 1)

    rows = []
    # bs is tiny & static here; a static loop keeps every op a plain 2-D
    # matmul / lane-wise softmax.
    # TODO(synk): for large batch, grid over batch ("parallel") instead of the
    # static loop, and hoist tanh(psi(listener_feature)) into a one-time
    # kernel to mirror the module's comp_listener_feature caching.
    for b in range(bs):
        lf_b = lf_ref[b]                                            # [T, E]
        comp_lf = jnp.tanh(
            jnp.dot(lf_b, wpsi, preferred_element_type=jnp.float32) + bpsi)  # [T, M]

        # energy_b = comp_ds[b] . comp_lf[t]  ->  [1, T]
        energy = jnp.dot(comp_ds[b:b + 1, :], comp_lf.T,
                         preferred_element_type=jnp.float32)         # [1, T]

        # mask positions t >= state_len[b] with -inf (PyTorch masked_fill_).
        energy = jnp.where(t_idx >= len_ref[b], -jnp.inf, energy)

        # numerically-stable softmax over the (lane) time axis.
        m = jnp.max(energy, axis=-1, keepdims=True)
        e = jnp.exp(energy - m)
        att = e / jnp.sum(e, axis=-1, keepdims=True)                 # [1, T]

        ctx = jnp.dot(att, lf_b, preferred_element_type=jnp.float32)  # [1, E]

        rows.append(jnp.concatenate([att, ctx], axis=-1))             # [1, T+E]

    # Single packed full-tile store (lane-packed output slab).
    out_ref[...] = jnp.concatenate(rows, axis=0)                       # [bs, T+E]


def attention_forward(decoder_state, listener_feature, state_len, prep):
    """One Attention.forward. Returns (attention_score [bs,T], context [bs,E])."""
    bs, T, E = listener_feature.shape
    lens = jnp.asarray(state_len, dtype=jnp.int32)

    vmem = pl.BlockSpec(memory_space=pltpu.MemorySpace.VMEM)
    smem = pl.BlockSpec(memory_space=pltpu.MemorySpace.SMEM)

    packed = pl.pallas_call(
        attention_kernel,
        out_shape=jax.ShapeDtypeStruct((bs, T + E), jnp.float32),
        in_specs=[smem, vmem, vmem, vmem, vmem, vmem],
        out_specs=vmem,
    )(lens, decoder_state, listener_feature,
      prep["w_phi_t"], prep["w_psi_t"], prep["b_psi"])

    return packed[:, :T], packed[:, T:]


def init_attention_params(key, mlp_out_size, encoder_out_size, decoder_state_size):
    """PyTorch nn.Linear-style init: uniform(+-1/sqrt(fan_in))."""
    kp, kw, kb = jax.random.split(key, 3)
    b_phi = 1.0 / jnp.sqrt(jnp.float32(decoder_state_size))
    b_psi = 1.0 / jnp.sqrt(jnp.float32(encoder_out_size))
    u = lambda k, shape, b: jax.random.uniform(k, shape, jnp.float32, -b, b)
    return {
        "w_phi": u(kp, (mlp_out_size, decoder_state_size), b_phi),  # phi: no bias
        "w_psi": u(kw, (mlp_out_size, encoder_out_size), b_psi),
        "b_psi": u(kb, (mlp_out_size,), b_psi),
    }


def prepare_attention_params(params):
    """One-time prep (NOT per forward): transpose to [in, out], bias -> [1, M]."""
    return {
        "w_phi_t": jnp.asarray(params["w_phi"].T),        # [D, M]
        "w_psi_t": jnp.asarray(params["w_psi"].T),        # [E, M]
        "b_psi": params["b_psi"].reshape(1, -1),          # [1, M]
    }


def _attention_ref(decoder_state, listener_feature, state_len, params):
    """Pure-JAX reference with identical semantics to the PyTorch module."""
    comp_lf = jnp.tanh(listener_feature @ params["w_psi"].T + params["b_psi"])
    comp_ds = jnp.tanh(decoder_state @ params["w_phi"].T)
    energy = jnp.einsum("btm,bm->bt", comp_lf, comp_ds)
    T = listener_feature.shape[1]
    mask = jnp.arange(T)[None, :] >= jnp.asarray(state_len)[:, None]
    energy = jnp.where(mask, -jnp.inf, energy)
    att = jax.nn.softmax(energy, axis=-1)
    ctx = jnp.einsum("bt,bte->be", att, listener_feature)
    return att, ctx


if __name__ == "__main__":
    bs, seq = 2, 8
    encoder_out_size, decoder_state_size, mlp_out_size = 32, 32, 32

    key = jax.random.PRNGKey(0)
    k_params, k_dec, k_lf = jax.random.split(key, 3)

    params = init_attention_params(k_params, mlp_out_size,
                                   encoder_out_size, decoder_state_size)
    prep = prepare_attention_params(params)   # one-time weight prep

    decoder_state = jax.random.normal(k_dec, (bs, decoder_state_size), jnp.float32)
    listener_feature = jax.random.normal(k_lf, (bs, seq, encoder_out_size), jnp.float32)
    state_len = [8, 5]   # second sequence has 3 padded (masked) frames

    att, ctx = attention_forward(decoder_state, listener_feature, state_len, prep)
    att = jax.block_until_ready(att)
    ctx = jax.block_until_ready(ctx)

    # Correctness vs pure-JAX reference.
    att_r, ctx_r = _attention_ref(decoder_state, listener_feature, state_len, params)
    assert jnp.allclose(att, att_r, atol=1e-4), "attention_score mismatch vs reference"
    assert jnp.allclose(ctx, ctx_r, atol=1e-4), "context mismatch vs reference"
    assert jnp.allclose(jnp.sum(att, axis=-1), 1.0, atol=1e-5), "softmax rows must sum to 1"
    assert float(jnp.max(jnp.abs(att[1, 5:]))) == 0.0, "masked positions must get 0 score"

    print("KERNEL_OK")
</pallas_src>

<mosaic_0001>
module attributes {stable_mosaic.version = 11 : i64} {
  func.func @attention_kernel(%arg0: memref<2xi32, #tpu.memory_space<smem>>, %arg1: memref<2x32xf32, #tpu.memory_space<vmem>>, %arg2: memref<2x8x32xf32, #tpu.memory_space<vmem>>, %arg3: memref<32x32xf32, #tpu.memory_space<vmem>>, %arg4: memref<32x32xf32, #tpu.memory_space<vmem>>, %arg5: memref<1x32xf32, #tpu.memory_space<vmem>>, %arg6: memref<2x40xf32, #tpu.memory_space<vmem>>) attributes {dimension_semantics = [], scalar_prefetch = 0 : i64, scratch_operands = 0 : i64, tpu.core_type = #tpu.core_type<tc>} {
    %c0 = arith.constant 0 : index
    %c0_0 = arith.constant 0 : index
    %0 = vector.load %arg1[%c0, %c0_0] : memref<2x32xf32, #tpu.memory_space<vmem>>, vector<2x32xf32>
    %c0_1 = arith.constant 0 : index
    %c0_2 = arith.constant 0 : index
    %1 = vector.load %arg3[%c0_1, %c0_2] : memref<32x32xf32, #tpu.memory_space<vmem>>, vector<32x32xf32>
    %cst = arith.constant dense<0.000000e+00> : vector<2x32xf32>
    %2 = tpu.matmul %0, %1, %cst {dimension_numbers = #tpu.dot_dimension_numbers<[1], [0], [0], [1], [0, 0, 1, 1], [], []>} : vector<2x32xf32>, vector<32x32xf32>, vector<2x32xf32> -> vector<2x32xf32>
    %3 = math.tanh %2 : vector<2x32xf32>
    %c0_3 = arith.constant 0 : index
    %c0_4 = arith.constant 0 : index
    %4 = vector.load %arg4[%c0_3, %c0_4] : memref<32x32xf32, #tpu.memory_space<vmem>>, vector<32x32xf32>
    %c0_5 = arith.constant 0 : index
    %c0_6 = arith.constant 0 : index
    %5 = vector.load %arg5[%c0_5, %c0_6] : memref<1x32xf32, #tpu.memory_space<vmem>>, vector<1x32xf32>
    %6 = tpu.iota {dimensions = array<i32: 1>} : vector<1x8xi32>
    %c0_7 = arith.constant 0 : index
    %c0_8 = arith.constant 0 : index
    %c0_9 = arith.constant 0 : index
    %7 = vector.load %arg2[%c0_7, %c0_8, %c0_9] : memref<2x8x32xf32, #tpu.memory_space<vmem>>, vector<1x8x32xf32>
    %8 = vector.shape_cast %7 : vector<1x8x32xf32> to vector<8x32xf32>
    %cst_10 = arith.constant dense<0.000000e+00> : vector<8x32xf32>
    %9 = tpu.matmul %8, %4, %cst_10 {dimension_numbers = #tpu.dot_dimension_numbers<[1], [0], [0], [1], [0, 0, 1, 1], [], []>} : vector<8x32xf32>, vector<32x32xf32>, vector<8x32xf32> -> vector<8x32xf32>
    %10 = vector.broadcast %5 : vector<1x32xf32> to vector<8x32xf32>
    %11 = arith.addf %9, %10 : vector<8x32xf32>
    %12 = math.tanh %11 : vector<8x32xf32>
    %13 = vector.extract_strided_slice %3 {offsets = [0, 0], sizes = [1, 32], strides = [1, 1]} : vector<2x32xf32> to vector<1x32xf32>
    %14 = tpu.transpose %12, [1, 0] : vector<8x32xf32> -> vector<32x8xf32>
    %cst_11 = arith.constant dense<0.000000e+00> : vector<1x8xf32>
    %15 = tpu.matmul %13, %14, %cst_11 {dimension_numbers = #tpu.dot_dimension_numbers<[1], [0], [0], [1], [0, 0, 1, 1], [], []>} : vector<1x32xf32>, vector<32x8xf32>, vector<1x8xf32> -> vector<1x8xf32>
    %c0_12 = arith.constant 0 : index
    %16 = memref.load %arg0[%c0_12] : memref<2xi32, #tpu.memory_space<smem>>
    %17 = vector.broadcast %16 : i32 to vector<1x8xi32>
    %18 = arith.cmpi sge, %6, %17 : vector<1x8xi32>
    %cst_13 = arith.constant 0xFF800000 : f32
    %19 = vector.broadcast %cst_13 : f32 to vector<1x8xf32>
    %20 = arith.select %18, %19, %15 : vector<1x8xi1>, vector<1x8xf32>
    %cst_14 = arith.constant dense<0xFF800000> : vector<1xf32>
    %21 = vector.multi_reduction <maximumf>, %20, %cst_14 [1] : vector<1x8xf32> to vector<1xf32>
    %22 = vector.shape_cast %21 : vector<1xf32> to vector<1x1xf32>
    %23 = vector.broadcast %22 : vector<1x1xf32> to vector<1x8xf32>
    %24 = arith.subf %20, %23 : vector<1x8xf32>
    %25 = math.exp %24 : vector<1x8xf32>
    %cst_15 = arith.constant dense<0.000000e+00> : vector<1xf32>
    %26 = vector.multi_reduction <add>, %25, %cst_15 [1] : vector<1x8xf32> to vector<1xf32>
    %27 = vector.shape_cast %26 : vector<1xf32> to vector<1x1xf32>
    %28 = vector.broadcast %27 : vector<1x1xf32> to vector<1x8xf32>
    %29 = arith.divf %25, %28 : vector<1x8xf32>
    %cst_16 = arith.constant dense<0.000000e+00> : vector<1x32xf32>
    %30 = tpu.matmul %29, %8, %cst_16 {dimension_numbers = #tpu.dot_dimension_numbers<[1], [0], [0], [1], [0, 0, 1, 1], [], []>} : vector<1x8xf32>, vector<8x32xf32>, vector<1x32xf32> -> vector<1x32xf32>
    %31 = tpu.concatenate %29, %30 in 1 : vector<1x8xf32>, vector<1x32xf32> -> vector<1x40xf32>
    %c1 = arith.constant 1 : index
    %c0_17 = arith.constant 0 : index
    %c0_18 = arith.constant 0 : index
    %32 = vector.load %arg2[%c1, %c0_17, %c0_18] : memref<2x8x32xf32, #tpu.memory_space<vmem>>, vector<1x8x32xf32>
    %33 = vector.shape_cast %32 : vector<1x8x32xf32> to vector<8x32xf32>
    %cst_19 = arith.constant dense<0.000000e+00> : vector<8x32xf32>
    %34 = tpu.matmul %33, %4, %cst_19 {dimension_numbers = #tpu.dot_dimension_numbers<[1], [0], [0], [1], [0, 0, 1, 1], [], []>} : vector<8x32xf32>, vector<32x32xf32>, vector<8x32xf32> -> vector<8x32xf32>
    %35 = vector.broadcast %5 : vector<1x32xf32> to vector<8x32xf32>
    %36 = arith.addf %34, %35 : vector<8x32xf32>
    %37 = math.tanh %36 : vector<8x32xf32>
    %38 = vector.extract_strided_slice %3 {offsets = [1, 0], sizes = [1, 32], strides = [1, 1]} : vector<2x32xf32> to vector<1x32xf32>
    %39 = tpu.transpose %37, [1, 0] : vector<8x32xf32> -> vector<32x8xf32>
    %cst_20 = arith.constant dense<0.000000e+00> : vector<1x8xf32>
    %40 = tpu.matmul %38, %39, %cst_20 {dimension_numbers = #tpu.dot_dimension_numbers<[1], [0], [0], [1], [0, 0, 1, 1], [], []>} : vector<1x32xf32>, vector<32x8xf32>, vector<1x8xf32> -> vector<1x8xf32>
    %c1_21 = arith.constant 1 : index
    %41 = memref.load %arg0[%c1_21] : memref<2xi32, #tpu.memory_space<smem>>
    %42 = vector.broadcast %41 : i32 to vector<1x8xi32>
    %43 = arith.cmpi sge, %6, %42 : vector<1x8xi32>
    %cst_22 = arith.constant 0xFF800000 : f32
    %44 = vector.broadcast %cst_22 : f32 to vector<1x8xf32>
    %45 = arith.select %43, %44, %40 : vector<1x8xi1>, vector<1x8xf32>
    %cst_23 = arith.constant dense<0xFF800000> : vector<1xf32>
    %46 = vector.multi_reduction <maximumf>, %45, %cst_23 [1] : vector<1x8xf32> to vector<1xf32>
    %47 = vector.shape_cast %46 : vector<1xf32> to vector<1x1xf32>
    %48 = vector.broadcast %47 : vector<1x1xf32> to vector<1x8xf32>
    %49 = arith.subf %45, %48 : vector<1x8xf32>
    %50 = math.exp %49 : vector<1x8xf32>
    %cst_24 = arith.constant dense<0.000000e+00> : vector<1xf32>
    %51 = vector.multi_reduction <add>, %50, %cst_24 [1] : vector<1x8xf32> to vector<1xf32>
    %52 = vector.shape_cast %51 : vector<1xf32> to vector<1x1xf32>
    %53 = vector.broadcast %52 : vector<1x1xf32> to vector<1x8xf32>
    %54 = arith.divf %50, %53 : vector<1x8xf32>
    %cst_25 = arith.constant dense<0.000000e+00> : vector<1x32xf32>
    %55 = tpu.matmul %54, %33, %cst_25 {dimension_numbers = #tpu.dot_dimension_numbers<[1], [0], [0], [1], [0, 0, 1, 1], [], []>} : vector<1x8xf32>, vector<8x32xf32>, vector<1x32xf32> -> vector<1x32xf32>
    %56 = tpu.concatenate %54, %55 in 1 : vector<1x8xf32>, vector<1x32xf32> -> vector<1x40xf32>
    %57 = tpu.concatenate %31, %56 in 0 : vector<1x40xf32>, vector<1x40xf32> -> vector<2x40xf32>
    %c0_26 = arith.constant 0 : index
    %c0_27 = arith.constant 0 : index
    %58 = vector.load %arg6[%c0_26, %c0_27] : memref<2x40xf32, #tpu.memory_space<vmem>>, vector<2x40xf32>
    tpu.vector_store %arg6[%c0_26, %c0_27], %57 {strides = array<i32>} : memref<2x40xf32, #tpu.memory_space<vmem>>, vector<2x40xf32>,
    return
  }
}

</mosaic_0001>

<llo_original>
// kernel: tpu_custom_call.1
$region0: #{tpu_custom_call.1}
  #allocation0 [shape = 'u32[]', space=smem, size = 0x4, offset = 0x4, fixed_abs, tag = 'smem constant byte address 0x4 - core index']
  #allocation1 [shape = 'u32[72,128]{1,0:T(1,128)}', space=vmem, size = 0x9000, scoped, tag = 'internal scratch']
  %s0 = inlined_call_operand.hbm [shape: s32[2], index: 0, kind: input, shape index: {}]
  %s1 = inlined_call_operand.hbm [shape: f32[2,32], index: 1, kind: input, shape index: {}]
  %s2 = inlined_call_operand.hbm [shape: f32[2,8,32], index: 2, kind: input, shape index: {}]
  %s3 = inlined_call_operand.hbm [shape: f32[32,32], index: 3, kind: input, shape index: {}]
  %s4 = inlined_call_operand.hbm [shape: f32[32,32], index: 4, kind: input, shape index: {}]
  %s5 = inlined_call_operand.vmem [shape: f32[1,32], index: 5, kind: input, shape index: {}]
  %s6 = inlined_call_operand.hbm [shape: f32[2,40], index: 6, kind: output, shape index: {}]
  %s7 = sld [smem:[#allocation0]]
  $region54: #{tpu_custom_call.1} parent=0
    _
  %s9 = ssub.s32 1, %s7
  %s10 = scalar_select 0, %s9, %s7
  $region1: #{tpu_custom_call.1} parent=0
    #allocation2 [shape = 'u8[512]{0}', space=smem, size = 0x200, scoped, tag = 'input window, operand 0, single buffered']
    #allocation3 [shape = 's32[1]{0}', space=sflag, size = 0x4, scoped, tag = 'scoped memory for tpu_custom_call.1']
    #allocation4 [shape = 's32[1]{0}', space=sflag, size = 0x4, scoped, tag = 'scoped memory for tpu_custom_call.1']
    #allocation5 [shape = 's32[1]{0}', space=sflag, size = 0x4, scoped, tag = 'scoped memory for tpu_custom_call.1']
    #allocation6 [shape = 'u8[1024]{0}', space=vmem, size = 0x400, scoped, tag = 'input window, operand 1, single buffered']
    #allocation7 [shape = 'u8[8192]{0}', space=vmem, size = 0x2000, scoped, tag = 'input window, operand 2, single buffered']
    #allocation8 [shape = 's32[1]{0}', space=sflag, size = 0x4, scoped, tag = 'scoped memory for tpu_custom_call.1']
    #allocation9 [shape = 'u8[16384]{0}', space=vmem, size = 0x4000, scoped, tag = 'input window, operand 3, single buffered']
    #allocation10 [shape = 'u8[16384]{0}', space=vmem, size = 0x4000, scoped, tag = 'input window, operand 4, single buffered']
    #allocation11 [shape = 's32[1]{0}', space=sflag, size = 0x4, scoped, tag = 'scoped memory for tpu_custom_call.1']
    #allocation12 [shape = 'u8[1024]{0}', space=vmem, size = 0x400, scoped, tag = 'output window, operand 0, single buffered']
    %11 = vsyncpa [#allocation5], 0
    %12 = vsyncpa [#allocation3], 0
    %13 = vsyncpa [#allocation8], 0
    %14 = vsyncpa [#allocation11], 0
    %15 = vsyncpa [#allocation4], 0
    // Predicated region
    $region2: #{tpu_custom_call.1} parent=1 // pred_check
      _
    $region3: #{tpu_custom_call.1} parent=1 // pred_check_branch
      %17 = sbr.rel (0) target = $region5
    $region4: #{tpu_custom_call.1} parent=1 // pred_region
      %19 = vsyncadd [#allocation5], 0
      %s21 = sshll.u32 %s0, 4
      %s22 = int_to_ptr.hbm [resolvable:$true] %s21
      %24 = dma.hbm_to_smem %s22, 16, [#allocation2], [#allocation5]
    $region5: #{tpu_custom_call.1} parent=1 // pred_fallthru
      _
    // Predicated region
    $region6: #{tpu_custom_call.1} parent=1 // pred_check
      _
    $region7: #{tpu_custom_call.1} parent=1 // pred_check_branch
      %26 = sbr.rel (0) target = $region9
    $region8: #{tpu_custom_call.1} parent=1 // pred_region
      %28 = vsyncadd [#allocation3], 0
      %s30 = sshll.u32 %s1, 4
      %s31 = int_to_ptr.hbm [resolvable:$true] %s30
      %s32 = sshll.u32 [#allocation6], 4
      %s33 = int_to_ptr.vmem [resolvable:$true] %s32
      %35 = dma.hbm_to_vmem [thread:$0]  %s31, 32, %s33, [#allocation3]
    $region9: #{tpu_custom_call.1} parent=1 // pred_fallthru
      _
    // Predicated region
    $region10: #{tpu_custom_call.1} parent=1 // pred_check
      _
    $region11: #{tpu_custom_call.1} parent=1 // pred_check_branch
      %37 = sbr.rel (0) target = $region13
    $region12: #{tpu_custom_call.1} parent=1 // pred_region
      %39 = vsyncadd [#allocation8], 0
      %s40 = sshll.u32 %s2, 4
      %s41 = int_to_ptr.hbm [resolvable:$true] %s40
      %s42 = sshll.u32 [#allocation7], 4
      %s43 = int_to_ptr.vmem [resolvable:$true] %s42
      %48 = dma.hbm_to_vmem [thread:$0]  %s41, 256, %s43, [#allocation8], 128, 128, 8
    $region13: #{tpu_custom_call.1} parent=1 // pred_fallthru
      _
    // Predicated region
    $region14: #{tpu_custom_call.1} parent=1 // pred_check
      _
    $region15: #{tpu_custom_call.1} parent=1 // pred_check_branch
      %50 = sbr.rel (0) target = $region17
    $region16: #{tpu_custom_call.1} parent=1 // pred_region
      %52 = vsyncadd [#allocation8], 0
      %s53 = sshll.u32 %s3, 4
      %s54 = int_to_ptr.hbm [resolvable:$true] %s53
      %s55 = sshll.u32 [#allocation9], 4
      %s56 = int_to_ptr.vmem [resolvable:$true] %s55
      %61 = dma.hbm_to_vmem [thread:$0]  %s54, 512, %s56, [#allocation8], 128, 128, 8
    $region17: #{tpu_custom_call.1} parent=1 // pred_fallthru
      _
    // Predicated region
    $region18: #{tpu_custom_call.1} parent=1 // pred_check
      _
    $region19: #{tpu_custom_call.1} parent=1 // pred_check_branch
      %63 = sbr.rel (0) target = $region21
    $region20: #{tpu_custom_call.1} parent=1 // pred_region
      %65 = vsyncadd [#allocation11], 0
      %s66 = sshll.u32 %s4, 4
      %s67 = int_to_ptr.hbm [resolvable:$true] %s66
      %s68 = sshll.u32 [#allocation10], 4
      %s69 = int_to_ptr.vmem [resolvable:$true] %s68
      %74 = dma.hbm_to_vmem [thread:$0]  %s67, 512, %s69, [#allocation11], 128, 128, 8
    $region21: #{tpu_custom_call.1} parent=1 // pred_fallthru
      _
    // Predicated region
    $region22: #{tpu_custom_call.1} parent=1 // pred_check
      _
    $region23: #{tpu_custom_call.1} parent=1 // pred_check_branch
      %76 = sbr.rel (0) target = $region25
    $region24: #{tpu_custom_call.1} parent=1 // pred_region
      _
    $region25: #{tpu_custom_call.1} parent=1 // pred_fallthru
      _
    // Predicated region
    $region26: #{tpu_custom_call.1} parent=1 // pred_check
      _
    $region27: #{tpu_custom_call.1} parent=1 // pred_check_branch
      %78 = sbr.rel (0) target = $region29
    $region28: #{tpu_custom_call.1} parent=1 // pred_region
      %80 = dma.done [#allocation5], 16
    $region29: #{tpu_custom_call.1} parent=1 // pred_fallthru
      _
    // Predicated region
    $region30: #{tpu_custom_call.1} parent=1 // pred_check
      _
    $region31: #{tpu_custom_call.1} parent=1 // pred_check_branch
      %82 = sbr.rel (0) target = $region33
    $region32: #{tpu_custom_call.1} parent=1 // pred_region
      %84 = dma.done [#allocation3], 32
    $region33: #{tpu_custom_call.1} parent=1 // pred_fallthru
      _
    // Predicated region
    $region34: #{tpu_custom_call.1} parent=1 // pred_check
      _
    $region35: #{tpu_custom_call.1} parent=1 // pred_check_branch
      %86 = sbr.rel (0) target = $region37
    $region36: #{tpu_custom_call.1} parent=1 // pred_region
      %88 = dma.done [#allocation8], 256
    $region37: #{tpu_custom_call.1} parent=1 // pred_fallthru
      _
    // Predicated region
    $region38: #{tpu_custom_call.1} parent=1 // pred_check
      _
    $region39: #{tpu_custom_call.1} parent=1 // pred_check_branch
      %90 = sbr.rel (0) target = $region41
    $region40: #{tpu_custom_call.1} parent=1 // pred_region
      %92 = dma.done [#allocation8], 512
    $region41: #{tpu_custom_call.1} parent=1 // pred_fallthru
      _
    // Predicated region
    $region42: #{tpu_custom_call.1} parent=1 // pred_check
      _
    $region43: #{tpu_custom_call.1} parent=1 // pred_check_branch
      %94 = sbr.rel (0) target = $region45
    $region44: #{tpu_custom_call.1} parent=1 // pred_region
      %96 = dma.done [#allocation11], 512
    $region45: #{tpu_custom_call.1} parent=1 // pred_fallthru
      _
    %97 = sfence
    %v98 = vld [vmem:[#allocation6] sm:$0x3]
    %v99 = vld [vmem:[#allocation9] sm:$0xff]
    %v100 = vld [vmem:[#allocation9 + $0x8] sm:$0xff]
    %v101 = vld [vmem:[#allocation9 + $0x10] sm:$0xff]
    %v102 = vld [vmem:[#allocation9 + $0x18] sm:$0xff]
    %vm103 = vcmask 261120
    %v105 = vsel %vm103, %v98, 0
    %107 = vmatpush.msra.mxu0 0.0
    %108 = vmatpush.msra.mxu0 0.0
    %109 = vmatpush.msra.mxu0 0.0
    %110 = vmatpush.msra.mxu0 0.0
    %111 = vmatpush.msra.mxu0 0.0
    %112 = vmatpush.msra.mxu0 0.0
    %113 = vmatpush.msra.mxu0 0.0
    %114 = vmatpush.msra.mxu0 0.0
    %115 = vmatpush.msra.mxu0 0.0
    %116 = vmatpush.msra.mxu0 0.0
    %117 = vmatpush.msra.mxu0 0.0
    %118 = vmatpush.msra.mxu0 0.0
    %119 = vmatpush.msra.mxu0 %v102
    %120 = vmatpush.msra.mxu0 %v101
    %121 = vmatpush.msra.mxu0 %v100
    %122 = vmatpush.msra.mxu0 %v99
    %123 = vmatmul.f32.gmra.mxu0 %v105
    %v124 = vpop.f32.mrf.mxu0
    %v125 = vadd.f32 0.0, %v124
    %126 = vdwg.mxu0
    %v127 = vtanh.pop %v125
    %v128 = vld [vmem:[#allocation10] sm:$0xff]
    %v129 = vld [vmem:[#allocation10 + $0x8] sm:$0xff]
    %v130 = vld [vmem:[#allocation10 + $0x10] sm:$0xff]
    %v131 = vld [vmem:[#allocation10 + $0x18] sm:$0xff]
    %v132 = vld [vmem:[%s5] sm:$0x1]
    %v133 = vlaneseq
    %v134 = vand.u32 %v133, 127
    %v135 = vld [vmem:[#allocation7] sm:$0xff]
    %v137 = vperm.slane %v132, 0
    %v140 = vsel %vm103, %v135, 0
    %142 = vmatpush.msra.mxu0 0.0
    %143 = vmatpush.msra.mxu0 0.0
    %144 = vmatpush.msra.mxu0 0.0
    %145 = vmatpush.msra.mxu0 0.0
    %146 = vmatpush.msra.mxu0 0.0
    %147 = vmatpush.msra.mxu0 0.0
    %148 = vmatpush.msra.mxu0 0.0
    %149 = vmatpush.msra.mxu0 0.0
    %150 = vmatpush.msra.mxu0 0.0
    %151 = vmatpush.msra.mxu0 0.0
    %152 = vmatpush.msra.mxu0 0.0
    %153 = vmatpush.msra.mxu0 0.0
    %154 = vmatpush.msra.mxu0 %v131
    %155 = vmatpush.msra.mxu0 %v130
    %156 = vmatpush.msra.mxu0 %v129
    %157 = vmatpush.msra.mxu0 %v128
    %158 = vmatmul.f32.gmra.mxu0 %v140
    %v159 = vpop.f32.mrf.mxu0
    %v160 = vadd.f32 %v137, %v159
    %161 = vdwg.mxu0
    %v162 = vtanh.pop %v160
    %v164 = vsel %vm103, %v127, 0
    %v167 = vsel %vm103, %v162, 0
    %169 = vmatpush.xpose.msra.mxu0 0.0
    %170 = vmatpush.xpose.msra.mxu0 0.0
    %171 = vmatpush.xpose.msra.mxu0 0.0
    %172 = vmatpush.xpose.msra.mxu0 0.0
    %173 = vmatpush.xpose.msra.mxu0 0.0
    %174 = vmatpush.xpose.msra.mxu0 0.0
    %175 = vmatpush.xpose.msra.mxu0 0.0
    %176 = vmatpush.xpose.msra.mxu0 0.0
    %177 = vmatpush.xpose.msra.mxu0 0.0
    %178 = vmatpush.xpose.msra.mxu0 0.0
    %179 = vmatpush.xpose.msra.mxu0 0.0
    %180 = vmatpush.xpose.msra.mxu0 0.0
    %181 = vmatpush.xpose.msra.mxu0 0.0
    %182 = vmatpush.xpose.msra.mxu0 0.0
    %183 = vmatpush.xpose.msra.mxu0 0.0
    %184 = vmatpush.xpose.msra.mxu0 %v167
    %185 = vmatmul.f32.gmra.mxu0 %v164
    %v186 = vpop.f32.mrf.mxu0
    %v187 = vadd.f32 0.0, %v186
    %188 = vdwg.mxu0
    %s189 = sld [smem:[#allocation2]]
    %v190 = vstv %s189
    %vm191 = vcmp.ge.s32.totalorder %v134, %v190
    %v192 = vsel %vm191, -inf, %v187
    %vm193 = vcmask 57344
    %v194 = vsel %vm193, %v192, -inf
    %195 = vmax.xlane.f32.xlu0 %v194
    %v196 = vpop.xlane.xlu0 %195
    %v197 = vsub.f32 %v192, %v196
    %v198 = vmul.f32 %v197, 1.442695
    %v199 = vpow.pop %v198
    %v200 = vsel %vm193, %v199, 0.0
    %201 = vadd.xlane.f32.xlu0 %v200
    %v202 = vpop.xlane.xlu0 %201
    %v203 = vrcp.pop %v202
    %v204 = vmul.f32 %v202, %v203
    %v205 = vsub.f32 1.0, %v204
    %v206 = vmul.f32 %v203, %v205
    %v207 = vadd.f32 %v203, %v206
    %vm208 = vweird.f32 %v202
    %vm209 = vweird.f32 %v203
    %vm210 = vmor %vm208, %vm209
    %v211 = vsel %vm210, %v203, %v207
    %v212 = vand.u32 2147483647, %v202
    %vm213 = vcmp.eq.f32.partialorder %v212, 8.507059e+37
    %v214 = vand.u32 %v202, 2147483648
    %v215 = vor.u32 1.1754944e-38, %v214
    %v216 = vsel %vm213, %v215, %v211
    %v217 = vmul.f32 %v199, %v216
    %vm218 = vcmask 64512
    %v220 = vsel %vm218, %v217, 0
    %222 = vmatpush.msra.mxu0 0.0
    %223 = vmatpush.msra.mxu0 0.0
    %224 = vmatpush.msra.mxu0 0.0
    %225 = vmatpush.msra.mxu0 0.0
    %226 = vmatpush.msra.mxu0 0.0
    %227 = vmatpush.msra.mxu0 0.0
    %228 = vmatpush.msra.mxu0 0.0
    %229 = vmatpush.msra.mxu0 0.0
    %230 = vmatpush.msra.mxu0 0.0
    %231 = vmatpush.msra.mxu0 0.0
    %232 = vmatpush.msra.mxu0 0.0
    %233 = vmatpush.msra.mxu0 0.0
    %234 = vmatpush.msra.mxu0 0.0
    %235 = vmatpush.msra.mxu0 0.0
    %236 = vmatpush.msra.mxu0 0.0
    %237 = vmatpush.msra.mxu0 %v135
    %238 = vmatmul.f32.gmra.mxu0 %v220
    %v239 = vpop.f32.mrf.mxu0
    %v240 = vadd.f32 0.0, %v239
    %241 = vdwg.mxu0
    %243 = vrot.lane.b32.xlu0 %v240, 8
    %v244 = vpop.permute.xlu0 %243
    %v246 = vsel %vm218, %v217, %v244
    %s247 = scalar_lea.vmem [#allocation7], 8
    %v248 = vld [vmem:[%s247] sm:$0xff]
    %v250 = vsel %vm103, %v248, 0
    %252 = vmatpush.msra.mxu0 0.0
    %253 = vmatpush.msra.mxu0 0.0
    %254 = vmatpush.msra.mxu0 0.0
    %255 = vmatpush.msra.mxu0 0.0
    %256 = vmatpush.msra.mxu0 0.0
    %257 = vmatpush.msra.mxu0 0.0
    %258 = vmatpush.msra.mxu0 0.0
    %259 = vmatpush.msra.mxu0 0.0
    %260 = vmatpush.msra.mxu0 0.0
    %261 = vmatpush.msra.mxu0 0.0
    %262 = vmatpush.msra.mxu0 0.0
    %263 = vmatpush.msra.mxu0 0.0
    %264 = vmatpush.msra.mxu0 %v131
    %265 = vmatpush.msra.mxu0 %v130
    %266 = vmatpush.msra.mxu0 %v129
    %267 = vmatpush.msra.mxu0 %v128
    %268 = vmatmul.f32.gmra.mxu0 %v250
    %v269 = vpop.f32.mrf.mxu0
    %v270 = vadd.f32 %v137, %v269
    %271 = vdwg.mxu0
    %v272 = vtanh.pop %v270
    %v273 = vrot.slane %v127, 1
    %v274 = vsel %vm103, %v273, 0
    %v277 = vsel %vm103, %v272, 0
    %279 = vmatpush.xpose.msra.mxu0 0.0
    %280 = vmatpush.xpose.msra.mxu0 0.0
    %281 = vmatpush.xpose.msra.mxu0 0.0
    %282 = vmatpush.xpose.msra.mxu0 0.0
    %283 = vmatpush.xpose.msra.mxu0 0.0
    %284 = vmatpush.xpose.msra.mxu0 0.0
    %285 = vmatpush.xpose.msra.mxu0 0.0
    %286 = vmatpush.xpose.msra.mxu0 0.0
    %287 = vmatpush.xpose.msra.mxu0 0.0
    %288 = vmatpush.xpose.msra.mxu0 0.0
    %289 = vmatpush.xpose.msra.mxu0 0.0
    %290 = vmatpush.xpose.msra.mxu0 0.0
    %291 = vmatpush.xpose.msra.mxu0 0.0
    %292 = vmatpush.xpose.msra.mxu0 0.0
    %293 = vmatpush.xpose.msra.mxu0 0.0
    %294 = vmatpush.xpose.msra.mxu0 %v277
    %295 = vmatmul.f32.gmra.mxu0 %v274
    %v296 = vpop.f32.mrf.mxu0
    %v297 = vadd.f32 0.0, %v296
    %298 = vdwg.mxu0
    %s299 = sld [smem:[#allocation2 + $0x1]]
    %v300 = vstv %s299
    %vm301 = vcmp.ge.s32.totalorder %v134, %v300
    %v302 = vsel %vm301, -inf, %v297
    %v303 = vsel %vm193, %v302, -inf
    %304 = vmax.xlane.f32.xlu0 %v303
    %v305 = vpop.xlane.xlu0 %304
    %v306 = vsub.f32 %v302, %v305
    %v307 = vmul.f32 %v306, 1.442695
    %v308 = vpow.pop %v307
    %v309 = vsel %vm193, %v308, 0.0
    %310 = vadd.xlane.f32.xlu0 %v309
    %v311 = vpop.xlane.xlu0 %310
    %v312 = vrcp.pop %v311
    %v313 = vmul.f32 %v311, %v312
    %v314 = vsub.f32 1.0, %v313
    %v315 = vmul.f32 %v312, %v314
    %v316 = vadd.f32 %v312, %v315
    %vm317 = vweird.f32 %v311
    %vm318 = vweird.f32 %v312
    %vm319 = vmor %vm317, %vm318
    %v320 = vsel %vm319, %v312, %v316
    %v321 = vand.u32 2147483647, %v311
    %vm322 = vcmp.eq.f32.partialorder %v321, 8.507059e+37
    %v323 = vand.u32 %v311, 2147483648
    %v324 = vor.u32 1.1754944e-38, %v323
    %v325 = vsel %vm322, %v324, %v320
    %v326 = vmul.f32 %v308, %v325
    %v328 = vsel %vm218, %v326, 0
    %330 = vmatpush.msra.mxu0 0.0
    %331 = vmatpush.msra.mxu0 0.0
    %332 = vmatpush.msra.mxu0 0.0
    %333 = vmatpush.msra.mxu0 0.0
    %334 = vmatpush.msra.mxu0 0.0
    %335 = vmatpush.msra.mxu0 0.0
    %336 = vmatpush.msra.mxu0 0.0
    %337 = vmatpush.msra.mxu0 0.0
    %338 = vmatpush.msra.mxu0 0.0
    %339 = vmatpush.msra.mxu0 0.0
    %340 = vmatpush.msra.mxu0 0.0
    %341 = vmatpush.msra.mxu0 0.0
    %342 = vmatpush.msra.mxu0 0.0
    %343 = vmatpush.msra.mxu0 0.0
    %344 = vmatpush.msra.mxu0 0.0
    %345 = vmatpush.msra.mxu0 %v248
    %346 = vmatmul.f32.gmra.mxu0 %v328
    %v347 = vpop.f32.mrf.mxu0
    %v348 = vadd.f32 0.0, %v347
    %349 = vdwg.mxu0
    %351 = vrot.lane.b32.xlu0 %v348, 8
    %v352 = vpop.permute.xlu0 %351
    %v354 = vsel %vm218, %v326, %v352
    %v356 = vrot.slane %v354, 7
    %vm358 = vcmask 1040384
    %v359 = vsel %vm358, %v246, %v356
    %vm360 = vcmask 320512
    %361 = vst.msk [vmem:[#allocation12] sm:$0x3] %vm360, %v359
    // Predicated region
    $region46: #{tpu_custom_call.1} parent=1 // pred_check
      _
    $region47: #{tpu_custom_call.1} parent=1 // pred_check_branch
      %363 = sbr.rel (0) target = $region49
    $region48: #{tpu_custom_call.1} parent=1 // pred_region
      %365 = vsyncadd [#allocation4], 0
      %s367 = sshll.u32 [#allocation12], 4
      %s368 = int_to_ptr.vmem [resolvable:$true] %s367
      %s369 = sshll.u32 %s6, 4
      %s370 = int_to_ptr.hbm [resolvable:$true] %s369
      %372 = dma.vmem_to_hbm [thread:$0]  %s368, 32, %s370, [#allocation4]
    $region49: #{tpu_custom_call.1} parent=1 // pred_fallthru
      _
    // Predicated region
    $region50: #{tpu_custom_call.1} parent=1 // pred_check
      _
    $region51: #{tpu_custom_call.1} parent=1 // pred_check_branch
      %374 = sbr.rel (0) target = $region53
    $region52: #{tpu_custom_call.1} parent=1 // pred_region
      %376 = dma.done [#allocation4], 32
    $region53: #{tpu_custom_call.1} parent=1 // pred_fallthru
      _
    %377 = vsyncpa [#allocation3], 1
    %378 = vsyncpa [#allocation8], 1
    %379 = vsyncpa [#allocation11], 1
    %380 = vsyncpa [#allocation4], 1
    %381 = vsyncpa [#allocation5], 1

</llo_original>
